<compile_context>
chip_gen: v6e
topology: v6e:2x2x1
jax: 0.10.0
libtpu: 0.0.40
codegen_flags: <defaults>
</compile_context>

<pallas_src>
import jax
import jax.numpy as jnp
from jax.experimental import pallas as pl
from jax.experimental.pallas import tpu as pltpu


def _dilated_conv_matmul_kernel(xc_ref, w_ref, b_ref, o_ref):
    """One grid step = one (batch, spatial-tile).

    xc_ref: (1, K, T)      bf16  im2col slab, spatial tile T on the lane axis
    w_ref : (C_out, K)     bf16  block-diagonal fused weight (all branches)
    b_ref : (C_out, 1)     f32   concatenated per-branch biases
    o_ref : (1, C_out, T)  f32   output slab (NCHW-flattened), lane-dense
    """
    acc = jnp.dot(w_ref[...], xc_ref[0], preferred_element_type=jnp.float32)
    o_ref[0] = acc + b_ref[...]


def dilated_conv2d(x_nchw, weights_oihw, biases, *, dilations, stride, padding):
    """weights_oihw: list (len == len(dilations)) of (C_out_per, C_in, KH, KW) arrays."""
    N, C_in, H, W = x_nchw.shape
    NB = len(dilations)
    C_out_per, _, KH, KW = weights_oihw[0].shape
    C_out_total = NB * C_out_per

    # Per-branch output size (must agree across branches for the channel concat).
    outs = []
    for d in dilations:
        pad_b = padding + d - 1
        ho = (H + 2 * pad_b - d * (KH - 1) - 1) // stride + 1
        wo = (W + 2 * pad_b - d * (KW - 1) - 1) // stride + 1
        outs.append((ho, wo))
    assert all(o == outs[0] for o in outs), "branch output sizes differ"
    H_out, W_out = outs[0]
    HW = H_out * W_out

    # Pad once with the max per-branch padding -- in bf16 (half the extra HBM traffic
    # of padding in f32).
    pad_max = padding + max(dilations) - 1
    x_pad = jnp.pad(x_nchw.astype(jnp.bfloat16),
                    ((0, 0), (0, 0), (pad_max, pad_max), (pad_max, pad_max)))

    # im2col gather in the wrapper: one static (strided) slice per (branch, kh, kw) tap.
    # K row order is (branch, kh, kw, c_in); spatial is flattened to a single lane axis.
    taps = []
    for d in dilations:
        off = pad_max - (padding + d - 1)
        for kh in range(KH):
            for kw in range(KW):
                h0, w0 = off + kh * d, off + kw * d
                taps.append(jax.lax.slice(
                    x_pad,
                    (0, 0, h0, w0),
                    (N, C_in,
                     h0 + (H_out - 1) * stride + 1,
                     w0 + (W_out - 1) * stride + 1),
                    (1, 1, stride, stride)))          # (N, C_in, H_out, W_out)
    K_total = NB * KH * KW * C_in
    x_col = jnp.stack(taps, axis=1).reshape(N, K_total, HW)      # bf16, HW on lanes

    # Block-diagonal fused weight: branch bi's (C_out_per, KH*KW*C_in) block sits on the
    # diagonal, so a single matmul computes every branch and writes straight into its
    # output-channel slice (no concat, no per-branch accumulators).
    kb = KH * KW * C_in
    w_bd = jnp.zeros((C_out_total, K_total), jnp.float32)
    for bi, w in enumerate(weights_oihw):
        blk = jnp.transpose(w, (0, 2, 3, 1)).reshape(C_out_per, kb)   # (co, kh, kw, ci)
        w_bd = w_bd.at[bi * C_out_per:(bi + 1) * C_out_per,
                       bi * kb:(bi + 1) * kb].set(blk.astype(jnp.float32))
    w_bd = w_bd.astype(jnp.bfloat16)

    b_col = jnp.concatenate([jnp.reshape(b, (C_out_per,)) for b in biases])
    b_col = b_col.astype(jnp.float32).reshape(C_out_total, 1)

    # Spatial tile: a multiple of 128 (lane-dense loads/stores) that divides HW, capped so
    # double-buffered blocks stay tiny even on v7x's 64 MiB VMEM.  If HW is not a multiple
    # of 128 a full-extent block is always legal.
    if HW % 128 == 0:
        tile = min(HW, 2048)
        while HW % tile != 0:
            tile -= 128
    else:
        tile = HW

    grid = (N, HW // tile)
    out_flat = pl.pallas_call(
        _dilated_conv_matmul_kernel,
        out_shape=jax.ShapeDtypeStruct((N, C_out_total, HW), jnp.float32),
        grid=grid,
        in_specs=[
            pl.BlockSpec((1, K_total, tile), lambda n, t: (n, 0, t)),
            pl.BlockSpec((C_out_total, K_total), lambda n, t: (0, 0)),
            pl.BlockSpec((C_out_total, 1), lambda n, t: (0, 0)),
        ],
        out_specs=pl.BlockSpec((1, C_out_total, tile), lambda n, t: (n, 0, t)),
        compiler_params=pltpu.CompilerParams(
            dimension_semantics=("parallel", "parallel"),
            vmem_limit_bytes=32 * 1024 * 1024,
        ),
    )(x_col, w_bd, b_col)

    # Already in NCHW order; just unflatten the spatial axis.
    return out_flat.reshape(N, C_out_total, H_out, W_out)


def _reference(x_nchw, weights_oihw, biases, *, dilations, stride, padding):
    """Pure-JAX reference mirroring torch nn.Conv2d branches + cat(dim=1)."""
    outs = []
    for w, b, d in zip(weights_oihw, biases, dilations):
        pad_b = padding + d - 1
        y = jax.lax.conv_general_dilated(
            x_nchw.astype(jnp.float32), w.astype(jnp.float32),
            window_strides=(stride, stride),
            padding=((pad_b, pad_b), (pad_b, pad_b)),
            rhs_dilation=(d, d),
            dimension_numbers=("NCHW", "OIHW", "NCHW"),
            precision=jax.lax.Precision.HIGHEST)
        outs.append(y + b[None, :, None, None])
    return jnp.concatenate(outs, axis=1)


if __name__ == "__main__":
    # Module config: DilatedConv2d(in_channels=4, out_channels=8, kernel_size=3,
    #                              dilated_ratios=[1, 2], stride=1, padding=1)
    in_channels, out_channels, kernel_size = 4, 8, 3
    dilated_ratios = [1, 2]
    stride, padding = 1, 1
    C_out_per = out_channels // len(dilated_ratios)

    key = jax.random.PRNGKey(0)
    kx, *kws = jax.random.split(key, 1 + 2 * len(dilated_ratios))
    x = jax.random.normal(kx, (2, in_channels, 16, 16), dtype=jnp.float32)

    weights, biases = [], []
    for i in range(len(dilated_ratios)):
        weights.append(0.1 * jax.random.normal(
            kws[2 * i], (C_out_per, in_channels, kernel_size, kernel_size),
            dtype=jnp.float32))
        biases.append(0.1 * jax.random.normal(kws[2 * i + 1], (C_out_per,),
                                              dtype=jnp.float32))

    out = dilated_conv2d(x, weights, biases,
                         dilations=dilated_ratios, stride=stride, padding=padding)
    out = jax.block_until_ready(out)

    # Reference with the same bf16 operand quantization the kernel uses (f32 accumulation).
    x_q = x.astype(jnp.bfloat16).astype(jnp.float32)
    w_q = [w.astype(jnp.bfloat16).astype(jnp.float32) for w in weights]
    ref = _reference(x_q, w_q, biases,
                     dilations=dilated_ratios, stride=stride, padding=padding)

    assert out.shape == (2, out_channels, 16, 16), out.shape
    assert jnp.allclose(out, ref, atol=1e-3, rtol=1e-3), float(jnp.max(jnp.abs(out - ref)))
    print("KERNEL_OK")
</pallas_src>

<mosaic_0001>
module attributes {stable_mosaic.version = 11 : i64} {
  func.func @_dilated_conv_matmul_kernel(%arg0: i32, %arg1: i32, %arg2: memref<1x72x256xbf16, #tpu.memory_space<vmem>>, %arg3: memref<8x72xbf16, #tpu.memory_space<vmem>>, %arg4: memref<8x1xf32, #tpu.memory_space<vmem>>, %arg5: memref<1x8x256xf32, #tpu.memory_space<vmem>>) attributes {dimension_semantics = [#tpu.dimension_semantics<parallel>, #tpu.dimension_semantics<parallel>], iteration_bounds = array<i64: 2, 1>, scalar_prefetch = 0 : i64, scratch_operands = 0 : i64, tpu.core_type = #tpu.core_type<tc>, window_params = [{transform_indices = @transform_0, window_bounds = array<i64: 1, 72, 256>}, {pipeline_mode = #tpu.pipeline_mode<synchronous>, transform_indices = @transform_1, window_bounds = array<i64: 8, 72>}, {pipeline_mode = #tpu.pipeline_mode<synchronous>, transform_indices = @transform_2, window_bounds = array<i64: 8, 1>}, {transform_indices = @transform_3, window_bounds = array<i64: 1, 8, 256>}]} {
    %c0 = arith.constant 0 : index
    %c0_0 = arith.constant 0 : index
    %0 = vector.load %arg3[%c0, %c0_0] : memref<8x72xbf16, #tpu.memory_space<vmem>>, vector<8x72xbf16>
    %c0_1 = arith.constant 0 : index
    %c0_2 = arith.constant 0 : index
    %c0_3 = arith.constant 0 : index
    %1 = vector.load %arg2[%c0_1, %c0_2, %c0_3] : memref<1x72x256xbf16, #tpu.memory_space<vmem>>, vector<1x72x256xbf16>
    %2 = vector.shape_cast %1 : vector<1x72x256xbf16> to vector<72x256xbf16>
    %cst = arith.constant dense<0.000000e+00> : vector<8x256xf32>
    %3 = tpu.matmul %0, %2, %cst {dimension_numbers = #tpu.dot_dimension_numbers<[1], [0], [0], [1], [0, 0, 1, 1], [], []>} : vector<8x72xbf16>, vector<72x256xbf16>, vector<8x256xf32> -> vector<8x256xf32>
    %c0_4 = arith.constant 0 : index
    %c0_5 = arith.constant 0 : index
    %4 = vector.load %arg4[%c0_4, %c0_5] : memref<8x1xf32, #tpu.memory_space<vmem>>, vector<8x1xf32>
    %5 = vector.broadcast %4 : vector<8x1xf32> to vector<8x256xf32>
    %6 = arith.addf %3, %5 : vector<8x256xf32>
    %c0_6 = arith.constant 0 : index
    %c0_7 = arith.constant 0 : index
    %c0_8 = arith.constant 0 : index
    %7 = vector.load %arg5[%c0_6, %c0_7, %c0_8] : memref<1x8x256xf32, #tpu.memory_space<vmem>>, vector<1x8x256xf32>
    %8 = vector.shape_cast %7 : vector<1x8x256xf32> to vector<8x256xf32>
    %9 = vector.shape_cast %6 : vector<8x256xf32> to vector<1x8x256xf32>
    tpu.vector_store %arg5[%c0_6, %c0_7, %c0_8], %9 {strides = array<i32>} : memref<1x8x256xf32, #tpu.memory_space<vmem>>, vector<1x8x256xf32>,
    return
  }
  func.func @transform_0(%arg0: i32, %arg1: i32) -> (i32, i32, i32) {
    %c0_i32 = arith.constant 0 : i32
    %c0_i32_0 = arith.constant 0 : i32
    return %arg0, %c0_i32, %arg1 : i32, i32, i32
  }
  func.func @transform_1(%arg0: i32, %arg1: i32) -> (i32, i32) {
    %c0_i32 = arith.constant 0 : i32
    %c0_i32_0 = arith.constant 0 : i32
    %c0_i32_1 = arith.constant 0 : i32
    return %c0_i32, %c0_i32_0 : i32, i32
  }
  func.func @transform_2(%arg0: i32, %arg1: i32) -> (i32, i32) {
    %c0_i32 = arith.constant 0 : i32
    %c0_i32_0 = arith.constant 0 : i32
    %c0_i32_1 = arith.constant 0 : i32
    return %c0_i32, %c0_i32_0 : i32, i32
  }
  func.func @transform_3(%arg0: i32, %arg1: i32) -> (i32, i32, i32) {
    %c0_i32 = arith.constant 0 : i32
    %c0_i32_0 = arith.constant 0 : i32
    return %arg0, %c0_i32, %arg1 : i32, i32, i32
  }
}

</mosaic_0001>

<llo_original>
// kernel: tpu_custom_call.1
$region0: #{tpu_custom_call.1}
  #allocation0 [shape = 'u32[]', space=smem, size = 0x4, offset = 0x4, fixed_abs, tag = 'smem constant byte address 0x4 - core index']
  #allocation1 [shape = 'u32[144,128]{1,0:T(1,128)}', space=vmem, size = 0x12000, scoped, tag = 'internal scratch']
  %s0 = inlined_call_operand.hbm [shape: bf16[2,72,256], index: 0, kind: input, shape index: {}]
  %s1 = inlined_call_operand.vmem [shape: bf16[8,72], index: 1, kind: input, shape index: {}]
  %s2 = inlined_call_operand.vmem [shape: f32[8,1], index: 2, kind: input, shape index: {}]
  %s3 = inlined_call_operand.hbm [shape: f32[2,8,256], index: 3, kind: output, shape index: {}]
  %s4 = sld [smem:[#allocation0]]
  $region49: #{tpu_custom_call.1} parent=0
    _
  %s6 = ssub.s32 1, %s4
  %s7 = scalar_select 0, %s6, %s4
  $region1: #{tpu_custom_call.1} parent=0
    #allocation2 [shape = 'u8[73728]{0}', space=vmem, size = 0x12000, scoped, tag = 'input window, operand 0']
    #allocation3 [shape = 's32[2]{0}', space=sflag, size = 0x8, scoped, tag = 'scoped memory for tpu_custom_call.1']
    #allocation4 [shape = 's32[2]{0}', space=sflag, size = 0x8, scoped, tag = 'scoped memory for tpu_custom_call.1']
    #allocation5 [shape = 'u8[16384]{0}', space=vmem, size = 0x4000, scoped, tag = 'output window, operand 0']
    %8 = vsyncpa [#allocation3], 0
    %s9 = scalar_lea.sflag [#allocation3], 1
    %10 = vsyncpa %s9, 0
    %11 = vsyncpa [#allocation4], 0
    %s12 = scalar_lea.sflag [#allocation4], 1
    %13 = vsyncpa %s12, 0
    loop: start=0, step=1, limit=4
    $region2: #{tpu_custom_call.1} parent=1 // loop_pre_header
      _
    $region3: #{tpu_custom_call.1} parent=1 // loop_header
      %s15 = sphi 0, %s19
      %p16 = scmp.ge.s32.totalorder %s15, 4
      %s22 = sphi 0, %s34
      %s23 = sphi 0, %s30
      %s24 = sphi 0, %s22
      %s25 = sphi 0, %s23
      %s26 = sphi 0, %s24
      %s27 = sphi 0, %s25
      %s39 = sphi 0, %s41
      %s42 = sphi 0, %s39
      %s43 = sphi 0, %s42
      %s59 = sphi 0, %s43
      %s63 = sphi 0, %s63
      %s65 = sphi 0, %s63
      %s66 = sphi 0, %s65
      %s80 = sphi 0, %s66
      %s84 = sphi 0, %s84
      %s86 = sphi 0, %s84
      %s87 = sphi 0, %s86
      %s101 = sphi 0, %s87
      %s109 = sphi 0, %s111
      %s112 = sphi 0, %s109
      %s113 = sphi 0, %s112
      %s129 = sphi 0, %s113
    $region4: #{tpu_custom_call.1} parent=1 // loop_header_branch
      %18 = sbr.rel (%p16) target = $region8
    $region5: #{tpu_custom_call.1} parent=1 // loop_body
      %s20 = ssub.s32 %s15, 1
      %s21 = ssub.s32 %s15, 2
      %s28 = sadd.s32 1, %s23
      %p29 = scmp.ge.s32.totalorder %s28, 1
      %s30 = scalar_select %p29, 0, %s28
      %s31 = sadd.s32 1, %s22
      %s32 = scalar_select %p29, %s31, %s22
      %p33 = scmp.ge.s32.totalorder %s32, 2
      %s34 = scalar_select %p33, 0, %s32
      %s35 = ssub.s32 %s22, %s34
      %s36 = ssub.s32 %s23, %s30
      %s37 = sor.u32 %s35, %s36
      %p38 = scmp.eq.s32.totalorder %s37, 0
      %s40 = sadd.s32 %s39, 1
      %s41 = scalar_select %p38, %s39, %s40
      %p44 = pneg %p38
      %p45 = scmp.eq.s32.totalorder %s15, 1
      %p46 = por %p44, %p45
      %p47 = scmp.ne.s32.totalorder %s39, %s42
      %p48 = scmp.eq.s32.totalorder %s15, 0
      %p49 = por %p47, %p48
      %p50 = scmp.ne.s32.totalorder %s39, %s42
      %p51 = scmp.eq.s32.totalorder %s20, 1
      %p52 = por %p50, %p51
      %p53 = scmp.ne.s32.totalorder %s42, %s43
      %p54 = scmp.eq.s32.totalorder %s20, 0
      %p55 = por %p53, %p54
      %p56 = scmp.ne.s32.totalorder %s42, %s43
      %p57 = scmp.eq.s32.totalorder %s21, 1
      %p58 = por %p56, %p57
      %p60 = scmp.ne.s32.totalorder %s43, %s59
      %p61 = scmp.eq.s32.totalorder %s21, 0
      %p62 = por %p60, %p61
      %s64 = sadd.s32 %s63, 1
      %p67 = scmp.eq.s32.totalorder %s15, 1
      %p68 = scmp.ne.s32.totalorder %s63, %s65
      %p69 = scmp.eq.s32.totalorder %s15, 0
      %p70 = por %p68, %p69
      %p71 = scmp.ne.s32.totalorder %s63, %s65
      %p72 = scmp.eq.s32.totalorder %s20, 1
      %p73 = por %p71, %p72
      %p74 = scmp.ne.s32.totalorder %s65, %s66
      %p75 = scmp.eq.s32.totalorder %s20, 0
      %p76 = por %p74, %p75
      %p77 = scmp.ne.s32.totalorder %s65, %s66
      %p78 = scmp.eq.s32.totalorder %s21, 1
      %p79 = por %p77, %p78
      %p81 = scmp.ne.s32.totalorder %s66, %s80
      %p82 = scmp.eq.s32.totalorder %s21, 0
      %p83 = por %p81, %p82
      %s85 = sadd.s32 %s84, 1
      %p88 = scmp.eq.s32.totalorder %s15, 1
      %p89 = scmp.ne.s32.totalorder %s84, %s86
      %p90 = scmp.eq.s32.totalorder %s15, 0
      %p91 = por %p89, %p90
      %p92 = scmp.ne.s32.totalorder %s84, %s86
      %p93 = scmp.eq.s32.totalorder %s20, 1
      %p94 = por %p92, %p93
      %p95 = scmp.ne.s32.totalorder %s86, %s87
      %p96 = scmp.eq.s32.totalorder %s20, 0
      %p97 = por %p95, %p96
      %p98 = scmp.ne.s32.totalorder %s86, %s87
      %p99 = scmp.eq.s32.totalorder %s21, 1
      %p100 = por %p98, %p99
      %p102 = scmp.ne.s32.totalorder %s87, %s101
      %p103 = scmp.eq.s32.totalorder %s21, 0
      %p104 = por %p102, %p103
      %s105 = ssub.s32 %s22, %s34
      %s106 = ssub.s32 %s23, %s30
      %s107 = sor.u32 %s105, %s106
      %p108 = scmp.eq.s32.totalorder %s107, 0
      %s110 = sadd.s32 %s109, 1
      %s111 = scalar_select %p108, %s109, %s110
      %p114 = pneg %p108
      %p115 = scmp.eq.s32.totalorder %s15, 1
      %p116 = por %p114, %p115
      %p117 = scmp.ne.s32.totalorder %s109, %s112
      %p118 = scmp.eq.s32.totalorder %s15, 0
      %p119 = por %p117, %p118
      %p120 = scmp.ne.s32.totalorder %s109, %s112
      %p121 = scmp.eq.s32.totalorder %s20, 1
      %p122 = por %p120, %p121
      %p123 = scmp.ne.s32.totalorder %s112, %s113
      %p124 = scmp.eq.s32.totalorder %s20, 0
      %p125 = por %p123, %p124
      %p126 = scmp.ne.s32.totalorder %s112, %s113
      %p127 = scmp.eq.s32.totalorder %s21, 1
      %p128 = por %p126, %p127
      %p130 = scmp.ne.s32.totalorder %s113, %s129
      %p131 = scmp.eq.s32.totalorder %s21, 0
      %p132 = por %p130, %p131
      %p133 = scmp.le.s32.totalorder 1, %s15
      %p134 = scmp.lt.s32.totalorder %s15, 3
      %p135 = pnand %p133, %p134
      %p136 = pneg %p135
      // Predicated region
      $region9: #{tpu_custom_call.1} parent=5 // pred_check
        _
      $region10: #{tpu_custom_call.1} parent=5 // pred_check_branch
        %138 = sbr.rel (%p135) target = $region12
      $region11: #{tpu_custom_call.1} parent=5 // pred_region
        %s139 = ssub.s32 %s15, 1
        // Predicated region
        $region13: #{tpu_custom_call.1} parent=11 // pred_check
          %p140 = pneg %p76
        $region14: #{tpu_custom_call.1} parent=11 // pred_check_branch
          %142 = sbr.rel (%p140) target = $region16
        $region15: #{tpu_custom_call.1} parent=11 // pred_region
          _
        $region16: #{tpu_custom_call.1} parent=11 // pred_fallthru
          _
        // Predicated region
        $region17: #{tpu_custom_call.1} parent=11 // pred_check
          %p143 = pneg %p97
        $region18: #{tpu_custom_call.1} parent=11 // pred_check_branch
          %145 = sbr.rel (%p143) target = $region20
        $region19: #{tpu_custom_call.1} parent=11 // pred_region
          _
        $region20: #{tpu_custom_call.1} parent=11 // pred_fallthru
          _
      $region12: #{tpu_custom_call.1} parent=5 // pred_fallthru
        _
      %p146 = scmp.lt.s32.totalorder %s15, 2
      // Predicated region
      $region21: #{tpu_custom_call.1} parent=5 // pred_check
        %p147 = pneg %p146
      $region22: #{tpu_custom_call.1} parent=5 // pred_check_branch
        %149 = sbr.rel (%p147) target = $region24
      $region23: #{tpu_custom_call.1} parent=5 // pred_region
        // Predicated region
        $region25: #{tpu_custom_call.1} parent=23 // pred_check
          %p150 = pneg %p49
        $region26: #{tpu_custom_call.1} parent=23 // pred_check_branch
          %152 = sbr.rel (%p150) target = $region28
        $region27: #{tpu_custom_call.1} parent=23 // pred_region
          %s153 = sand.u32 %s39, 1
          %s154 = scalar_lea.sflag [#allocation3], %s153
          %s155 = sand.u32 %s39, 1
          %s156 = smul.addr %s155, 72
          %s157 = scalar_lea.vmem [#allocation2], %s156
          %s158 = smul.u32 2, %s23
          %s160 = ssub.s32 1152, 1152
          %161 = vsyncadd %s154, %s160
          %s162 = smul.addr %s22, 18
          %s163 = sadd.s32 %s158, %s162
          %s164 = smul.addr %s163, 64
          %s165 = scalar_lea.hbm %s0, %s164
          %s166 = sshll.u32 %s157, 4
          %s167 = int_to_ptr.vmem [resolvable:$true] %s166
          %172 = dma.hbm_to_vmem [thread:$0]  %s165, 1152, %s167, %s154, 128, 128, 8
        $region28: #{tpu_custom_call.1} parent=23 // pred_fallthru
          _
      $region24: #{tpu_custom_call.1} parent=5 // pred_fallthru
        _
      %p173 = scmp.le.s32.totalorder 1, %s15
      %p174 = scmp.lt.s32.totalorder %s15, 3
      %p175 = pnand %p173, %p174
      %p176 = pneg %p175
      // Predicated region
      $region29: #{tpu_custom_call.1} parent=5 // pred_check
        _
      $region30: #{tpu_custom_call.1} parent=5 // pred_check_branch
        %178 = sbr.rel (%p175) target = $region32
      $region31: #{tpu_custom_call.1} parent=5 // pred_region
        %s179 = ssub.s32 %s15, 1
        %s180 = sand.u32 %s42, 1
        %s181 = scalar_lea.sflag [#allocation3], %s180
        %s182 = sand.u32 %s42, 1
        %s183 = smul.addr %s182, 72
        %s184 = scalar_lea.vmem [#allocation2], %s183
        // Predicated region
        $region33: #{tpu_custom_call.1} parent=31 // pred_check
          %p185 = pneg %p55
        $region34: #{tpu_custom_call.1} parent=31 // pred_check_branch
          %187 = sbr.rel (%p185) target = $region36
        $region35: #{tpu_custom_call.1} parent=31 // pred_region
          %188 = dma.done %s181, 1152
        $region36: #{tpu_custom_call.1} parent=31 // pred_fallthru
          _
        %s189 = sand.u32 %s42, 1
        %s190 = scalar_lea.sflag [#allocation3], %s189
        %s191 = sand.u32 %s42, 1
        %s192 = smul.addr %s191, 72
        %s193 = scalar_lea.vmem [#allocation2], %s192
        %p194 = pneg %p55
        %p195 = pneg %p52
        %p196 = pneg %p76
        %p197 = pneg %p73
        %p198 = pneg %p97
        %p199 = pneg %p94
        %p200 = pneg %p125
        %p201 = pneg %p122
        %s202 = sand.u32 %s112, 1
        %s203 = scalar_lea.sflag [#allocation4], %s202
        %s204 = sand.u32 %s112, 1
        %s205 = smul.addr %s204, 16
        %s206 = scalar_lea.vmem [#allocation5], %s205
        %s207 = smul.u32 2, %s25
        %s208 = smul.u32 2, %s25
        %v210 = vld [vmem:[%s1] sm:$0xf]
        %v211 = vld [vmem:[%s184] sm:$0xff]
        %v212 = vld [vmem:[%s184 + $0x8] sm:$0xff]
        %v213 = vld [vmem:[%s184 + $0x10] sm:$0xff]
        %v214 = vld [vmem:[%s184 + $0x18] sm:$0xff]
        %v215 = vld [vmem:[%s184 + $0x20] sm:$0xff]
        %v216 = vld [vmem:[%s184 + $0x28] sm:$0xff]
        %v217 = vld [vmem:[%s184 + $0x30] sm:$0xff]
        %v218 = vld [vmem:[%s184 + $0x38] sm:$0xff]
        %v219 = vld [vmem:[%s184 + $0x40] sm:$0xff]
        %v220 = vld [vmem:[%s2] sm:$0xff]
        %222 = vset.pattern.permute.xlu0 0
        %223 = vperm.xlu0 %222, %v220
        %v224 = vpop.permute.xlu0 %223
        %v235 = vunpack.c.l.b16 %v211
        %v236 = vunpack.c.h.b16 %v211
        %v237 = vunpack.c.l.b16 %v212
        %v238 = vunpack.c.h.b16 %v212
        %v239 = vunpack.c.l.b16 %v213
        %v240 = vunpack.c.h.b16 %v213
        %v241 = vunpack.c.l.b16 %v214
        %v242 = vunpack.c.h.b16 %v214
        %v243 = vunpack.c.l.b16 %v215
        %v244 = vunpack.c.h.b16 %v215
        %v245 = vunpack.c.l.b16 %v216
        %v246 = vunpack.c.h.b16 %v216
        %v247 = vunpack.c.l.b16 %v217
        %v248 = vunpack.c.h.b16 %v217
        %v249 = vunpack.c.l.b16 %v218
        %v250 = vunpack.c.h.b16 %v218
        %v251 = vunpack.c.l.b16 %v219
        %v252 = vunpack.c.h.b16 %v219
        %v253 = vpack.c.b16 %v237, %v235
        %v254 = vpack.c.b16 %v238, %v236
        %v255 = vpack.c.b16 %v241, %v239
        %v256 = vpack.c.b16 %v242, %v240
        %v257 = vpack.c.b16 %v245, %v243
        %v258 = vpack.c.b16 %v246, %v244
        %v259 = vpack.c.b16 %v249, %v247
        %v260 = vpack.c.b16 %v250, %v248
        %v261 = vpack.c.b16 %v251, %v251
        %v262 = vpack.c.b16 %v252, %v252
        %vm271 = vcmask 588800
        %v273 = vsel %vm271, %v210, 0
        %vm275 = vcmask 1043456
        %v277 = vsel %vm275, %v261, 0
        %v280 = vsel %vm275, %v262, 0
        %282 = vmatprep.subr.bf16.mxu0 0
        %283 = vmatpush1.bf16.msra.mxu0 0
        %284 = vmatprep.subr.bf16.mxu0 0
        %285 = vmatpush1.bf16.msra.mxu0 0
        %286 = vmatprep.subr.bf16.mxu0 0
        %287 = vmatpush1.bf16.msra.mxu0 0
        %288 = vmatprep.subr.bf16.mxu0 %v280
        %289 = vmatpush1.bf16.msra.mxu0 %v277
        %290 = vmatprep.subr.bf16.mxu0 %v260
        %291 = vmatpush1.bf16.msra.mxu0 %v259
        %292 = vmatprep.subr.bf16.mxu0 %v258
        %293 = vmatpush1.bf16.msra.mxu0 %v257
        %294 = vmatprep.subr.bf16.mxu0 %v256
        %295 = vmatpush1.bf16.msra.mxu0 %v255
        %296 = vmatprep.subr.bf16.mxu0 %v254
        %297 = vmatpush1.bf16.msra.mxu0 %v253
        %298 = vmatprep.subr.bf16.mxu0 0
        %299 = vmatpush2.bf16.msra.mxu0 0
        %300 = vmatprep.subr.bf16.mxu0 0
        %301 = vmatpush2.bf16.msra.mxu0 0
        %302 = vmatprep.subr.bf16.mxu0 0
        %303 = vmatpush2.bf16.msra.mxu0 0
        %304 = vmatprep.subr.bf16.mxu0 0
        %305 = vmatpush2.bf16.msra.mxu0 0
        %306 = vmatprep.subr.bf16.mxu0 0
        %307 = vmatpush2.bf16.msra.mxu0 0
        %308 = vmatprep.subr.bf16.mxu0 0
        %309 = vmatpush2.bf16.msra.mxu0 0
        %310 = vmatprep.subr.bf16.mxu0 0
        %311 = vmatpush2.bf16.msra.mxu0 0
        %312 = vmatprep.subr.bf16.mxu0 0
        %313 = vmatpush2.bf16.msra.mxu0 0
        %314 = vmatprep.mubr.bf16.mxu0 0
        %315 = vmatmul.mubr.bf16.gmra.mxu0 %v273
        %v316 = vpop.f32.mrf.mxu0
        %v317 = vadd.f32 %v224, %v316
        %v318 = vpop.f32.mrf.mxu0
        %v319 = vadd.f32 %v224, %v318
        %v320 = vpop.f32.mrf.mxu0
        %v321 = vpop.f32.mrf.mxu0
        %322 = vdwg.mxu0
        %323 = vst [vmem:[%s206] sm:$0xff] %v317
        %324 = vst [vmem:[%s206 + $0x8] sm:$0xff] %v319
        %s325 = sand.u32 %s112, 1
        %s326 = scalar_lea.sflag [#allocation4], %s325
        %s327 = sand.u32 %s112, 1
        %s328 = smul.addr %s327, 16
        %s329 = scalar_lea.vmem [#allocation5], %s328
        // Predicated region
        $region37: #{tpu_custom_call.1} parent=31 // pred_check
          %p330 = pneg %p122
        $region38: #{tpu_custom_call.1} parent=31 // pred_check_branch
          %332 = sbr.rel (%p330) target = $region40
        $region39: #{tpu_custom_call.1} parent=31 // pred_region
          %s333 = smul.u32 2, %s25
          %s335 = ssub.s32 256, 256
          %336 = vsyncadd %s326, %s335
          %s337 = smul.addr %s24, 2
          %s338 = sadd.s32 %s333, %s337
          %s339 = smul.addr %s338, 128
          %s340 = scalar_lea.hbm %s3, %s339
          %s342 = sshll.u32 %s329, 4
          %s343 = int_to_ptr.vmem [resolvable:$true] %s342
          %345 = dma.vmem_to_hbm [thread:$0]  %s343, 256, %s340, %s326
        $region40: #{tpu_custom_call.1} parent=31 // pred_fallthru
          _
      $region32: #{tpu_custom_call.1} parent=5 // pred_fallthru
        _
      %p346 = scmp.le.s32.totalorder 2, %s15
      // Predicated region
      $region41: #{tpu_custom_call.1} parent=5 // pred_check
        %p347 = pneg %p346
      $region42: #{tpu_custom_call.1} parent=5 // pred_check_branch
        %349 = sbr.rel (%p347) target = $region44
      $region43: #{tpu_custom_call.1} parent=5 // pred_region
        %s350 = ssub.s32 %s15, 2
        // Predicated region
        $region45: #{tpu_custom_call.1} parent=43 // pred_check
          %p351 = pneg %p128
        $region46: #{tpu_custom_call.1} parent=43 // pred_check_branch
          %353 = sbr.rel (%p351) target = $region48
        $region47: #{tpu_custom_call.1} parent=43 // pred_region
          %s354 = sand.u32 %s113, 1
          %s355 = scalar_lea.sflag [#allocation4], %s354
          %s356 = sand.u32 %s113, 1
          %s357 = smul.addr %s356, 16
          %s358 = scalar_lea.vmem [#allocation5], %s357
          %359 = dma.done %s355, 256
        $region48: #{tpu_custom_call.1} parent=43 // pred_fallthru
          _
      $region44: #{tpu_custom_call.1} parent=5 // pred_fallthru
        _
    $region6: #{tpu_custom_call.1} parent=1 // loop_footer
      %s19 = sadd.s32 1, %s15
    $region7: #{tpu_custom_call.1} parent=1 // loop_footer_branch
      %14 = sbr.rel target = $region3
    $region8: #{tpu_custom_call.1} parent=1 // loop_exit
      _
    %360 = vsyncpa [#allocation3], 1
    %s361 = scalar_lea.sflag [#allocation3], 1
    %362 = vsyncpa %s361, 1
    %363 = vsyncpa [#allocation4], 1
    %s364 = scalar_lea.sflag [#allocation4], 1
    %365 = vsyncpa %s364, 1

</llo_original>
